<compile_context>
chip_gen: v7x
topology: tpu7x:2x2x1
jax: 0.10.0
libtpu: 0.0.40
codegen_flags: <defaults>
</compile_context>

<pallas_src>
import jax
import jax.numpy as jnp
from jax.experimental import pallas as pl
from jax.experimental.pallas import tpu as pltpu


# ---------------------------------------------------------------------------
# kernel 1: per-residue work, grid (B, L/TM)  — O(B*L), hoisted out of (i, j)
# ---------------------------------------------------------------------------
def row_kernel(x_ref, wr_ref, br_ref, w12_ref, b12_ref, wpm2_ref, bp2_ref,
               res_pred_ref, a12_ref):
    x = x_ref[0]                                                     # [TM, D_in]

    # residue-level prediction: Linear(res_emb)
    res_pred_ref[0] = (
        jnp.dot(x, wr_ref[...], preferred_element_type=jnp.float32) + br_ref[...]
    ).astype(res_pred_ref.dtype)

    # fused ReLU(Linear1 | Linear2): one wide matmul instead of two narrow ones
    m12 = jnp.maximum(
        jnp.dot(x, w12_ref[...], preferred_element_type=jnp.float32) + b12_ref[...],
        0.0)                                                         # [TM, 2*d_mid]

    # block-diagonal pair_middle projection -> packed [a1 | a2] in one store.
    # The pair bias bp is folded into the a1 half only, so downstream it is
    # added exactly once per (i, j).
    a12_ref[0] = (
        jnp.dot(m12, wpm2_ref[...], preferred_element_type=jnp.float32) + bp2_ref[...]
    ).astype(a12_ref.dtype)


# ---------------------------------------------------------------------------
# kernel 2: pair prediction, grid (B, L/TI, L/TJ) — HBM-bandwidth-bound stream
# ---------------------------------------------------------------------------
def pair_kernel(a12i_ref, a12j_ref, att_ref, wat_ref, out_ref):
    ti = att_ref.shape[1]
    tj = att_ref.shape[2]
    h = att_ref.shape[3]
    p = a12i_ref.shape[2] // 2

    # cast right after the DMA (free VPU work hidden under the copy)
    att = att_ref[0].astype(wat_ref.dtype)                           # [TI, TJ, H]
    att_term = jnp.dot(att.reshape(ti * tj, h), wat_ref[...],
                       preferred_element_type=jnp.float32)           # [TI*TJ, P] f32
    # lane-dense domain: same row-major data viewed as [TI, TJ*P]
    att_term = att_term.reshape(ti, tj * p)

    # (m1_i + m2_j) @ Wpm + b  ==  a1_i + a2_j  (bias already folded into a1)
    a1 = a12i_ref[0][:, :p]                                          # [TI, P]
    a2 = a12j_ref[0][:, p:]                                          # [TJ, P]
    a1_t = jnp.broadcast_to(a1[:, None, :], (ti, tj, p)).reshape(ti, tj * p)
    a2_r = a2.reshape(1, tj * p)                                     # sublane-bcast add

    out_ref[0] = (att_term + a1_t + a2_r).astype(out_ref.dtype)      # [TI, TJ*P]


# ---------------------------------------------------------------------------
# wrapper helpers
# ---------------------------------------------------------------------------
def _round_up(x, m):
    return ((x + m - 1) // m) * m


def _pick_div(l_pad, target):
    """Largest of {256,128,64,32,16,8} that divides l_pad and is <= target."""
    for t in (256, 128, 64, 32, 16, 8):
        if t <= target and t <= l_pad and l_pad % t == 0:
            return t
    return l_pad


def _chip_config():
    """Per-generation (vmem_limit_bytes, per-attention-tile byte budget)."""
    kind = ""
    try:
        kind = jax.devices()[0].device_kind.lower()
    except Exception:
        pass
    if "v7" in kind or "7x" in kind:
        # v7x: only 64 MiB VMEM per TensorCore -> smaller tiles, leave headroom.
        return 48 << 20, 12 << 20
    if "v6" in kind or "v5" in kind:
        # 128 MiB physical VMEM -> big tiles, fewer grid steps (closer to HBM roofline).
        return 100 << 20, 36 << 20
    return 64 << 20, 20 << 20


def esmwrap_forward(res_emb, pair_atten, params, *,
                    atten_compute_dtype=jnp.bfloat16):
    """ESMwrap head.

    res_emb:    [B, L, D_in]  (f32)
    pair_atten: [B, L, L, H]  — streamed in its given dtype; pass bf16/fp8 from
                the producer when possible to halve the dominant HBM stream.
    """
    B, L, D_in = res_emb.shape
    H = pair_atten.shape[-1]
    res_out = params["wr"].shape[1]
    d_mid = params["w1"].shape[1]
    P = params["wpm"].shape[1]

    vmem_limit, att_tile_budget = _chip_config()

    # ---- length padding + tile selection (no divisor games on raw L) ----
    base = 128 if L > 128 else _round_up(max(L, 8), 8)
    L_pad = _round_up(L, base)
    TM = _pick_div(L_pad, 256)                 # row-kernel tile
    TJ = _pick_div(L_pad, 128)                 # key tile (lane-dense TJ*P output)
    att_itemsize = pair_atten.dtype.itemsize
    TI = 8                                     # query tile, sized to the VMEM budget
    for cand in (128, 64, 32, 16, 8):
        if cand <= L_pad and L_pad % cand == 0:
            TI = cand
            if cand * TJ * H * att_itemsize <= att_tile_budget:
                break

    if L_pad != L:
        pad = L_pad - L
        res_emb = jnp.pad(res_emb, ((0, 0), (0, pad), (0, 0)))
        pair_atten = jnp.pad(pair_atten, ((0, 0), (0, pad), (0, pad), (0, 0)))

    # ---- fold / pack the small weights (once per call, negligible bytes) ----
    w12 = jnp.concatenate([params["w1"], params["w2"]], axis=1)      # [D_in, 2*d_mid]
    b12 = jnp.concatenate([params["b1"], params["b2"]], axis=1)      # [1, 2*d_mid]
    wpm = params["wpm"]
    wpm2 = jnp.zeros((2 * d_mid, 2 * P), wpm.dtype)                  # block-diag(Wpm, Wpm)
    wpm2 = wpm2.at[:d_mid, :P].set(wpm).at[d_mid:, P:].set(wpm)
    bp2 = jnp.concatenate([params["bp"], jnp.zeros_like(params["bp"])], axis=1)
    wat_c = params["wat"].astype(atten_compute_dtype)                # tiny [H, P]

    def full_row(shape):
        return pl.BlockSpec(shape, lambda b, m: (0,) * len(shape))

    def full_pair(shape):
        return pl.BlockSpec(shape, lambda b, i, j: (0,) * len(shape))

    # ---- kernel 1: per-residue work ----
    res_pred_pad, a12 = pl.pallas_call(
        row_kernel,
        out_shape=[
            jax.ShapeDtypeStruct((B, L_pad, res_out), jnp.float32),
            jax.ShapeDtypeStruct((B, L_pad, 2 * P), jnp.float32),
        ],
        grid=(B, L_pad // TM),
        in_specs=[
            pl.BlockSpec((1, TM, D_in), lambda b, m: (b, m, 0)),     # res_emb
            full_row((D_in, res_out)),                               # wr
            full_row((1, res_out)),                                  # br
            full_row((D_in, 2 * d_mid)),                             # w1|w2
            full_row((1, 2 * d_mid)),                                # b1|b2
            full_row((2 * d_mid, 2 * P)),                            # blockdiag(wpm)
            full_row((1, 2 * P)),                                    # [bp | 0]
        ],
        out_specs=[
            pl.BlockSpec((1, TM, res_out), lambda b, m: (b, m, 0)),
            pl.BlockSpec((1, TM, 2 * P), lambda b, m: (b, m, 0)),
        ],
        compiler_params=pltpu.CompilerParams(
            dimension_semantics=("parallel", "parallel"),
            vmem_limit_bytes=vmem_limit),
    )(res_emb, params["wr"], params["br"], w12, b12, wpm2, bp2)

    # ---- kernel 2: pair prediction, streaming attention tiles ----
    pair_flat = pl.pallas_call(
        pair_kernel,
        out_shape=jax.ShapeDtypeStruct((B, L_pad, L_pad * P), jnp.float32),
        grid=(B, L_pad // TI, L_pad // TJ),
        in_specs=[
            pl.BlockSpec((1, TI, 2 * P), lambda b, i, j: (b, i, 0)),        # a12 (query)
            pl.BlockSpec((1, TJ, 2 * P), lambda b, i, j: (b, j, 0)),        # a12 (key)
            pl.BlockSpec((1, TI, TJ, H), lambda b, i, j: (b, i, j, 0)),     # attention
            full_pair((H, P)),                                              # wat
        ],
        out_specs=pl.BlockSpec((1, TI, TJ * P), lambda b, i, j: (b, i, j)),
        compiler_params=pltpu.CompilerParams(
            dimension_semantics=("parallel", "parallel", "parallel"),
            vmem_limit_bytes=vmem_limit),
    )(a12, a12, pair_atten, wat_c)

    res_pred = res_pred_pad[:, :L]
    pair_pred = pair_flat.reshape(B, L_pad, L_pad, P)[:, :L, :L]
    return res_pred, pair_pred


def ref_forward(res_emb, atten, Wr, br, W1, b1, W2, b2, Wp, bp):
    # plain-JAX reference mirroring the PyTorch code exactly (f32)
    res_pred = res_emb @ Wr.T + br
    m1 = jax.nn.relu(res_emb @ W1.T + b1)
    m2 = jax.nn.relu(res_emb @ W2.T + b2)
    pair_middle = m1[:, :, None, :] + m2[:, None, :, :]
    cat = jnp.concatenate([pair_middle, atten], axis=-1)
    pair_pred = cat @ Wp.T + bp
    return res_pred, pair_pred


if __name__ == "__main__":
    key = jax.random.PRNGKey(0)

    # small synthetic "config": res_in_feature=32, res_out_feature=16,
    # pair_out_feature=8, pair_in_feature (= total attention heads) = 4
    B = 2
    res_in, res_out, pair_out, n_heads_total = 32, 16, 8, 4
    d_mid = int((res_in * pair_out) ** 0.5)   # = 16, as in the module

    ks = jax.random.split(key, 8)

    def lin_params(k, fin, fout):
        kw, kb = jax.random.split(k)
        # PyTorch nn.Linear convention: weight [out, in]
        w = jax.random.normal(kw, (fout, fin), jnp.float32) * 0.05
        b = jax.random.normal(kb, (fout,), jnp.float32) * 0.05
        return w, b

    Wr, br = lin_params(ks[2], res_in, res_out)                   # res_pred_linear
    W1, b1 = lin_params(ks[3], res_in, d_mid)                     # pair_median_linear_1
    W2, b2 = lin_params(ks[4], res_in, d_mid)                     # pair_median_linear_2
    Wp, bp = lin_params(ks[5], n_heads_total + d_mid, pair_out)   # pair_pred_linear

    # transpose to right-multiply layout; split the pair weight into the
    # pair_middle part (first d_mid rows of the concat) and the atten part.
    params = dict(
        wr=Wr.T, br=br[None, :],
        w1=W1.T, b1=b1[None, :],
        w2=W2.T, b2=b2[None, :],
        wpm=Wp.T[:d_mid], wat=Wp.T[d_mid:], bp=bp[None, :],
    )

    for L in (8, 7):   # L=7 exercises the length-padding path
        kx, ka = jax.random.split(jax.random.fold_in(ks[0], L))
        res_emb = jax.random.normal(kx, (B, L, res_in), jnp.float32)
        pair_atten = jax.nn.softmax(
            jax.random.normal(ka, (B, L, L, n_heads_total), jnp.float32), axis=2)

        res_pred, pair_pred = esmwrap_forward(res_emb, pair_atten, params)
        jax.block_until_ready((res_pred, pair_pred))

        ref_res, ref_pair = ref_forward(res_emb, pair_atten,
                                        Wr, br, W1, b1, W2, b2, Wp, bp)
        assert res_pred.shape == ref_res.shape and pair_pred.shape == ref_pair.shape
        # res_pred is pure f32 -> tight tolerance
        assert jnp.allclose(res_pred, ref_res, atol=1e-4, rtol=1e-4)
        # attention term computed in bf16 (f32 accumulation) -> looser tolerance
        assert jnp.allclose(pair_pred, ref_pair, atol=1e-2, rtol=1e-2)

    print("KERNEL_OK")
</pallas_src>

<mosaic_0001>
module attributes {stable_mosaic.version = 11 : i64} {
  func.func @row_kernel(%arg0: i32, %arg1: i32, %arg2: memref<1x8x32xf32, #tpu.memory_space<vmem>>, %arg3: memref<32x16xf32, #tpu.memory_space<vmem>>, %arg4: memref<1x16xf32, #tpu.memory_space<vmem>>, %arg5: memref<32x32xf32, #tpu.memory_space<vmem>>, %arg6: memref<1x32xf32, #tpu.memory_space<vmem>>, %arg7: memref<32x16xf32, #tpu.memory_space<vmem>>, %arg8: memref<1x16xf32, #tpu.memory_space<vmem>>, %arg9: memref<1x8x16xf32, #tpu.memory_space<vmem>>, %arg10: memref<1x8x16xf32, #tpu.memory_space<vmem>>) attributes {dimension_semantics = [#tpu.dimension_semantics<parallel>, #tpu.dimension_semantics<parallel>], iteration_bounds = array<i64: 2, 1>, scalar_prefetch = 0 : i64, scratch_operands = 0 : i64, tpu.core_type = #tpu.core_type<tc>, window_params = [{transform_indices = @transform_0, window_bounds = array<i64: 1, 8, 32>}, {pipeline_mode = #tpu.pipeline_mode<synchronous>, transform_indices = @transform_1, window_bounds = array<i64: 32, 16>}, {pipeline_mode = #tpu.pipeline_mode<synchronous>, transform_indices = @transform_2, window_bounds = array<i64: 1, 16>}, {pipeline_mode = #tpu.pipeline_mode<synchronous>, transform_indices = @transform_3, window_bounds = array<i64: 32, 32>}, {pipeline_mode = #tpu.pipeline_mode<synchronous>, transform_indices = @transform_4, window_bounds = array<i64: 1, 32>}, {pipeline_mode = #tpu.pipeline_mode<synchronous>, transform_indices = @transform_5, window_bounds = array<i64: 32, 16>}, {pipeline_mode = #tpu.pipeline_mode<synchronous>, transform_indices = @transform_6, window_bounds = array<i64: 1, 16>}, {transform_indices = @transform_7, window_bounds = array<i64: 1, 8, 16>}, {transform_indices = @transform_8, window_bounds = array<i64: 1, 8, 16>}]} {
    %c0 = arith.constant 0 : index
    %c0_0 = arith.constant 0 : index
    %c0_1 = arith.constant 0 : index
    %0 = vector.load %arg2[%c0, %c0_0, %c0_1] : memref<1x8x32xf32, #tpu.memory_space<vmem>>, vector<1x8x32xf32>
    %1 = vector.shape_cast %0 : vector<1x8x32xf32> to vector<8x32xf32>
    %c0_2 = arith.constant 0 : index
    %c0_3 = arith.constant 0 : index
    %2 = vector.load %arg3[%c0_2, %c0_3] : memref<32x16xf32, #tpu.memory_space<vmem>>, vector<32x16xf32>
    %cst = arith.constant dense<0.000000e+00> : vector<8x16xf32>
    %3 = tpu.matmul %1, %2, %cst {dimension_numbers = #tpu.dot_dimension_numbers<[1], [0], [0], [1], [0, 0, 1, 1], [], []>} : vector<8x32xf32>, vector<32x16xf32>, vector<8x16xf32> -> vector<8x16xf32>
    %c0_4 = arith.constant 0 : index
    %c0_5 = arith.constant 0 : index
    %4 = vector.load %arg4[%c0_4, %c0_5] : memref<1x16xf32, #tpu.memory_space<vmem>>, vector<1x16xf32>
    %5 = vector.broadcast %4 : vector<1x16xf32> to vector<8x16xf32>
    %6 = arith.addf %3, %5 : vector<8x16xf32>
    %c0_6 = arith.constant 0 : index
    %c0_7 = arith.constant 0 : index
    %c0_8 = arith.constant 0 : index
    %7 = vector.load %arg9[%c0_6, %c0_7, %c0_8] : memref<1x8x16xf32, #tpu.memory_space<vmem>>, vector<1x8x16xf32>
    %8 = vector.shape_cast %7 : vector<1x8x16xf32> to vector<8x16xf32>
    %9 = vector.shape_cast %6 : vector<8x16xf32> to vector<1x8x16xf32>
    tpu.vector_store %arg9[%c0_6, %c0_7, %c0_8], %9 {strides = array<i32>} : memref<1x8x16xf32, #tpu.memory_space<vmem>>, vector<1x8x16xf32>,
    %c0_9 = arith.constant 0 : index
    %c0_10 = arith.constant 0 : index
    %10 = vector.load %arg5[%c0_9, %c0_10] : memref<32x32xf32, #tpu.memory_space<vmem>>, vector<32x32xf32>
    %cst_11 = arith.constant dense<0.000000e+00> : vector<8x32xf32>
    %11 = tpu.matmul %1, %10, %cst_11 {dimension_numbers = #tpu.dot_dimension_numbers<[1], [0], [0], [1], [0, 0, 1, 1], [], []>} : vector<8x32xf32>, vector<32x32xf32>, vector<8x32xf32> -> vector<8x32xf32>
    %c0_12 = arith.constant 0 : index
    %c0_13 = arith.constant 0 : index
    %12 = vector.load %arg6[%c0_12, %c0_13] : memref<1x32xf32, #tpu.memory_space<vmem>>, vector<1x32xf32>
    %13 = vector.broadcast %12 : vector<1x32xf32> to vector<8x32xf32>
    %14 = arith.addf %11, %13 : vector<8x32xf32>
    %cst_14 = arith.constant 0.000000e+00 : f32
    %15 = vector.broadcast %cst_14 : f32 to vector<8x32xf32>
    %16 = arith.maximumf %14, %15 : vector<8x32xf32>
    %c0_15 = arith.constant 0 : index
    %c0_16 = arith.constant 0 : index
    %17 = vector.load %arg7[%c0_15, %c0_16] : memref<32x16xf32, #tpu.memory_space<vmem>>, vector<32x16xf32>
    %cst_17 = arith.constant dense<0.000000e+00> : vector<8x16xf32>
    %18 = tpu.matmul %16, %17, %cst_17 {dimension_numbers = #tpu.dot_dimension_numbers<[1], [0], [0], [1], [0, 0, 1, 1], [], []>} : vector<8x32xf32>, vector<32x16xf32>, vector<8x16xf32> -> vector<8x16xf32>
    %c0_18 = arith.constant 0 : index
    %c0_19 = arith.constant 0 : index
    %19 = vector.load %arg8[%c0_18, %c0_19] : memref<1x16xf32, #tpu.memory_space<vmem>>, vector<1x16xf32>
    %20 = vector.broadcast %19 : vector<1x16xf32> to vector<8x16xf32>
    %21 = arith.addf %18, %20 : vector<8x16xf32>
    %c0_20 = arith.constant 0 : index
    %c0_21 = arith.constant 0 : index
    %c0_22 = arith.constant 0 : index
    %22 = vector.load %arg10[%c0_20, %c0_21, %c0_22] : memref<1x8x16xf32, #tpu.memory_space<vmem>>, vector<1x8x16xf32>
    %23 = vector.shape_cast %22 : vector<1x8x16xf32> to vector<8x16xf32>
    %24 = vector.shape_cast %21 : vector<8x16xf32> to vector<1x8x16xf32>
    tpu.vector_store %arg10[%c0_20, %c0_21, %c0_22], %24 {strides = array<i32>} : memref<1x8x16xf32, #tpu.memory_space<vmem>>, vector<1x8x16xf32>,
    return
  }
  func.func @transform_0(%arg0: i32, %arg1: i32) -> (i32, i32, i32) {
    %c0_i32 = arith.constant 0 : i32
    %c0_i32_0 = arith.constant 0 : i32
    return %arg0, %arg1, %c0_i32 : i32, i32, i32
  }
  func.func @transform_1(%arg0: i32, %arg1: i32) -> (i32, i32) {
    %c0_i32 = arith.constant 0 : i32
    %c0_i32_0 = arith.constant 0 : i32
    %c0_i32_1 = arith.constant 0 : i32
    return %c0_i32, %c0_i32_0 : i32, i32
  }
  func.func @transform_2(%arg0: i32, %arg1: i32) -> (i32, i32) {
    %c0_i32 = arith.constant 0 : i32
    %c0_i32_0 = arith.constant 0 : i32
    %c0_i32_1 = arith.constant 0 : i32
    return %c0_i32, %c0_i32_0 : i32, i32
  }
  func.func @transform_3(%arg0: i32, %arg1: i32) -> (i32, i32) {
    %c0_i32 = arith.constant 0 : i32
    %c0_i32_0 = arith.constant 0 : i32
    %c0_i32_1 = arith.constant 0 : i32
    return %c0_i32, %c0_i32_0 : i32, i32
  }
  func.func @transform_4(%arg0: i32, %arg1: i32) -> (i32, i32) {
    %c0_i32 = arith.constant 0 : i32
    %c0_i32_0 = arith.constant 0 : i32
    %c0_i32_1 = arith.constant 0 : i32
    return %c0_i32, %c0_i32_0 : i32, i32
  }
  func.func @transform_5(%arg0: i32, %arg1: i32) -> (i32, i32) {
    %c0_i32 = arith.constant 0 : i32
    %c0_i32_0 = arith.constant 0 : i32
    %c0_i32_1 = arith.constant 0 : i32
    return %c0_i32, %c0_i32_0 : i32, i32
  }
  func.func @transform_6(%arg0: i32, %arg1: i32) -> (i32, i32) {
    %c0_i32 = arith.constant 0 : i32
    %c0_i32_0 = arith.constant 0 : i32
    %c0_i32_1 = arith.constant 0 : i32
    return %c0_i32, %c0_i32_0 : i32, i32
  }
  func.func @transform_7(%arg0: i32, %arg1: i32) -> (i32, i32, i32) {
    %c0_i32 = arith.constant 0 : i32
    %c0_i32_0 = arith.constant 0 : i32
    return %arg0, %arg1, %c0_i32 : i32, i32, i32
  }
  func.func @transform_8(%arg0: i32, %arg1: i32) -> (i32, i32, i32) {
    %c0_i32 = arith.constant 0 : i32
    %c0_i32_0 = arith.constant 0 : i32
    return %arg0, %arg1, %c0_i32 : i32, i32, i32
  }
}

</mosaic_0001>

<llo_original>
// kernel: tpu_custom_call.1
$region0: #{tpu_custom_call.1}
  #allocation0 [shape = 'u32[]', space=smem, size = 0x4, offset = 0x4, fixed_abs, tag = 'smem constant byte address 0x4 - core index']
  #allocation1 [shape = 'u32[144,128]{1,0:T(1,128)}', space=vmem, size = 0x12000, scoped, tag = 'internal scratch']
  %s0 = inlined_call_operand.hbm [shape: f32[2,8,32], index: 0, kind: input, shape index: {}]
  %s1 = inlined_call_operand.hbm [shape: f32[32,16], index: 1, kind: input, shape index: {}]
  %s2 = inlined_call_operand.hbm [shape: f32[1,16], index: 2, kind: input, shape index: {}]
  %s3 = inlined_call_operand.hbm [shape: f32[32,32], index: 3, kind: input, shape index: {}]
  %s4 = inlined_call_operand.hbm [shape: f32[1,32], index: 4, kind: input, shape index: {}]
  %s5 = inlined_call_operand.hbm [shape: f32[32,16], index: 5, kind: input, shape index: {}]
  %s6 = inlined_call_operand.hbm [shape: f32[1,16], index: 6, kind: input, shape index: {}]
  %s7 = inlined_call_operand.hbm [shape: f32[2,8,16], index: 7, kind: output, shape index: {0}]
  %s8 = inlined_call_operand.hbm [shape: f32[2,8,16], index: 8, kind: output, shape index: {1}]
  %9 = xla_tuple %s7, %s8
  %s10 = sld [smem:[#allocation0]]
  $region97: #{tpu_custom_call.1} parent=0
    _
  %s12 = ssub.s32 1, %s10
  %s13 = scalar_select 0, %s12, %s10
  $region1: #{tpu_custom_call.1} parent=0
    #allocation2 [shape = 'u8[8192]{0}', space=vmem, size = 0x2000, scoped, tag = 'input window, operand 0']
    #allocation3 [shape = 's32[2]{0}', space=sflag, size = 0x8, scoped, tag = 'scoped memory for tpu_custom_call.1']
    #allocation4 [shape = 's32[2]{0}', space=sflag, size = 0x8, scoped, tag = 'scoped memory for tpu_custom_call.1']
    #allocation5 [shape = 'u8[16384]{0}', space=vmem, size = 0x4000, scoped, tag = 'input window, operand 1, single buffered']
    #allocation6 [shape = 's32[1]{0}', space=sflag, size = 0x4, scoped, tag = 'scoped memory for tpu_custom_call.1']
    #allocation7 [shape = 'u8[512]{0}', space=vmem, size = 0x400, scoped, tag = 'input window, operand 2, single buffered']
    #allocation8 [shape = 'u8[16384]{0}', space=vmem, size = 0x4000, scoped, tag = 'input window, operand 3, single buffered']
    #allocation9 [shape = 's32[1]{0}', space=sflag, size = 0x4, scoped, tag = 'scoped memory for tpu_custom_call.1']
    #allocation10 [shape = 'u8[512]{0}', space=vmem, size = 0x400, scoped, tag = 'input window, operand 4, single buffered']
    #allocation11 [shape = 'u8[16384]{0}', space=vmem, size = 0x4000, scoped, tag = 'input window, operand 5, single buffered']
    #allocation12 [shape = 's32[1]{0}', space=sflag, size = 0x4, scoped, tag = 'scoped memory for tpu_custom_call.1']
    #allocation13 [shape = 'u8[512]{0}', space=vmem, size = 0x400, scoped, tag = 'input window, operand 6, single buffered']
    #allocation14 [shape = 'u8[8192]{0}', space=vmem, size = 0x2000, scoped, tag = 'output window, operand 0']
    #allocation15 [shape = 'u8[8192]{0}', space=vmem, size = 0x2000, scoped, tag = 'output window, operand 1']
    #allocation16 [shape = 's32[2]{0}', space=sflag, size = 0x8, scoped, tag = 'scoped memory for tpu_custom_call.1']
    %14 = vsyncpa [#allocation3], 0
    %s15 = scalar_lea.sflag [#allocation3], 1
    %16 = vsyncpa %s15, 0
    %17 = vsyncpa [#allocation6], 0
    %18 = vsyncpa [#allocation9], 0
    %19 = vsyncpa [#allocation12], 0
    %20 = vsyncpa [#allocation4], 0
    %s21 = scalar_lea.sflag [#allocation4], 1
    %22 = vsyncpa %s21, 0
    %23 = vsyncpa [#allocation16], 0
    %s24 = scalar_lea.sflag [#allocation16], 1
    %25 = vsyncpa %s24, 0
    loop: start=0, step=1, limit=4
    $region2: #{tpu_custom_call.1} parent=1 // loop_pre_header
      _
    $region3: #{tpu_custom_call.1} parent=1 // loop_header
      %s27 = sphi 0, %s31
      %p28 = scmp.ge.s32.totalorder %s27, 4
      %s34 = sphi 0, %s46
      %s35 = sphi 0, %s42
      %s36 = sphi 0, %s34
      %s37 = sphi 0, %s35
      %s38 = sphi 0, %s36
      %s39 = sphi 0, %s37
      %s51 = sphi 0, %s53
      %s54 = sphi 0, %s51
      %s55 = sphi 0, %s54
      %s71 = sphi 0, %s55
      %s75 = sphi 0, %s75
      %s77 = sphi 0, %s75
      %s78 = sphi 0, %s77
      %s92 = sphi 0, %s78
      %s96 = sphi 0, %s96
      %s98 = sphi 0, %s96
      %s99 = sphi 0, %s98
      %s113 = sphi 0, %s99
      %s117 = sphi 0, %s117
      %s119 = sphi 0, %s117
      %s120 = sphi 0, %s119
      %s134 = sphi 0, %s120
      %s138 = sphi 0, %s138
      %s140 = sphi 0, %s138
      %s141 = sphi 0, %s140
      %s155 = sphi 0, %s141
      %s159 = sphi 0, %s159
      %s161 = sphi 0, %s159
      %s162 = sphi 0, %s161
      %s176 = sphi 0, %s162
      %s180 = sphi 0, %s180
      %s182 = sphi 0, %s180
      %s183 = sphi 0, %s182
      %s197 = sphi 0, %s183
      %s205 = sphi 0, %s207
      %s208 = sphi 0, %s205
      %s209 = sphi 0, %s208
      %s225 = sphi 0, %s209
      %s233 = sphi 0, %s235
      %s236 = sphi 0, %s233
      %s237 = sphi 0, %s236
      %s253 = sphi 0, %s237
    $region4: #{tpu_custom_call.1} parent=1 // loop_header_branch
      %30 = sbr.rel (%p28) target = $region8
    $region5: #{tpu_custom_call.1} parent=1 // loop_body
      %s32 = ssub.s32 %s27, 1
      %s33 = ssub.s32 %s27, 2
      %s40 = sadd.s32 1, %s35
      %p41 = scmp.ge.s32.totalorder %s40, 1
      %s42 = scalar_select %p41, 0, %s40
      %s43 = sadd.s32 1, %s34
      %s44 = scalar_select %p41, %s43, %s34
      %p45 = scmp.ge.s32.totalorder %s44, 2
      %s46 = scalar_select %p45, 0, %s44
      %s47 = ssub.s32 %s34, %s46
      %s48 = ssub.s32 %s35, %s42
      %s49 = sor.u32 %s47, %s48
      %p50 = scmp.eq.s32.totalorder %s49, 0
      %s52 = sadd.s32 %s51, 1
      %s53 = scalar_select %p50, %s51, %s52
      %p56 = pneg %p50
      %p57 = scmp.eq.s32.totalorder %s27, 1
      %p58 = por %p56, %p57
      %p59 = scmp.ne.s32.totalorder %s51, %s54
      %p60 = scmp.eq.s32.totalorder %s27, 0
      %p61 = por %p59, %p60
      %p62 = scmp.ne.s32.totalorder %s51, %s54
      %p63 = scmp.eq.s32.totalorder %s32, 1
      %p64 = por %p62, %p63
      %p65 = scmp.ne.s32.totalorder %s54, %s55
      %p66 = scmp.eq.s32.totalorder %s32, 0
      %p67 = por %p65, %p66
      %p68 = scmp.ne.s32.totalorder %s54, %s55
      %p69 = scmp.eq.s32.totalorder %s33, 1
      %p70 = por %p68, %p69
      %p72 = scmp.ne.s32.totalorder %s55, %s71
      %p73 = scmp.eq.s32.totalorder %s33, 0
      %p74 = por %p72, %p73
      %s76 = sadd.s32 %s75, 1
      %p79 = scmp.eq.s32.totalorder %s27, 1
      %p80 = scmp.ne.s32.totalorder %s75, %s77
      %p81 = scmp.eq.s32.totalorder %s27, 0
      %p82 = por %p80, %p81
      %p83 = scmp.ne.s32.totalorder %s75, %s77
      %p84 = scmp.eq.s32.totalorder %s32, 1
      %p85 = por %p83, %p84
      %p86 = scmp.ne.s32.totalorder %s77, %s78
      %p87 = scmp.eq.s32.totalorder %s32, 0
      %p88 = por %p86, %p87
      %p89 = scmp.ne.s32.totalorder %s77, %s78
      %p90 = scmp.eq.s32.totalorder %s33, 1
      %p91 = por %p89, %p90
      %p93 = scmp.ne.s32.totalorder %s78, %s92
      %p94 = scmp.eq.s32.totalorder %s33, 0
      %p95 = por %p93, %p94
      %s97 = sadd.s32 %s96, 1
      %p100 = scmp.eq.s32.totalorder %s27, 1
      %p101 = scmp.ne.s32.totalorder %s96, %s98
      %p102 = scmp.eq.s32.totalorder %s27, 0
      %p103 = por %p101, %p102
      %p104 = scmp.ne.s32.totalorder %s96, %s98
      %p105 = scmp.eq.s32.totalorder %s32, 1
      %p106 = por %p104, %p105
      %p107 = scmp.ne.s32.totalorder %s98, %s99
      %p108 = scmp.eq.s32.totalorder %s32, 0
      %p109 = por %p107, %p108
      %p110 = scmp.ne.s32.totalorder %s98, %s99
      %p111 = scmp.eq.s32.totalorder %s33, 1
      %p112 = por %p110, %p111
      %p114 = scmp.ne.s32.totalorder %s99, %s113
      %p115 = scmp.eq.s32.totalorder %s33, 0
      %p116 = por %p114, %p115
      %s118 = sadd.s32 %s117, 1
      %p121 = scmp.eq.s32.totalorder %s27, 1
      %p122 = scmp.ne.s32.totalorder %s117, %s119
      %p123 = scmp.eq.s32.totalorder %s27, 0
      %p124 = por %p122, %p123
      %p125 = scmp.ne.s32.totalorder %s117, %s119
      %p126 = scmp.eq.s32.totalorder %s32, 1
      %p127 = por %p125, %p126
      %p128 = scmp.ne.s32.totalorder %s119, %s120
      %p129 = scmp.eq.s32.totalorder %s32, 0
      %p130 = por %p128, %p129
      %p131 = scmp.ne.s32.totalorder %s119, %s120
      %p132 = scmp.eq.s32.totalorder %s33, 1
      %p133 = por %p131, %p132
      %p135 = scmp.ne.s32.totalorder %s120, %s134
      %p136 = scmp.eq.s32.totalorder %s33, 0
      %p137 = por %p135, %p136
      %s139 = sadd.s32 %s138, 1
      %p142 = scmp.eq.s32.totalorder %s27, 1
      %p143 = scmp.ne.s32.totalorder %s138, %s140
      %p144 = scmp.eq.s32.totalorder %s27, 0
      %p145 = por %p143, %p144
      %p146 = scmp.ne.s32.totalorder %s138, %s140
      %p147 = scmp.eq.s32.totalorder %s32, 1
      %p148 = por %p146, %p147
      %p149 = scmp.ne.s32.totalorder %s140, %s141
      %p150 = scmp.eq.s32.totalorder %s32, 0
      %p151 = por %p149, %p150
      %p152 = scmp.ne.s32.totalorder %s140, %s141
      %p153 = scmp.eq.s32.totalorder %s33, 1
      %p154 = por %p152, %p153
      %p156 = scmp.ne.s32.totalorder %s141, %s155
      %p157 = scmp.eq.s32.totalorder %s33, 0
      %p158 = por %p156, %p157
      %s160 = sadd.s32 %s159, 1
      %p163 = scmp.eq.s32.totalorder %s27, 1
      %p164 = scmp.ne.s32.totalorder %s159, %s161
      %p165 = scmp.eq.s32.totalorder %s27, 0
      %p166 = por %p164, %p165
      %p167 = scmp.ne.s32.totalorder %s159, %s161
      %p168 = scmp.eq.s32.totalorder %s32, 1
      %p169 = por %p167, %p168
      %p170 = scmp.ne.s32.totalorder %s161, %s162
      %p171 = scmp.eq.s32.totalorder %s32, 0
      %p172 = por %p170, %p171
      %p173 = scmp.ne.s32.totalorder %s161, %s162
      %p174 = scmp.eq.s32.totalorder %s33, 1
      %p175 = por %p173, %p174
      %p177 = scmp.ne.s32.totalorder %s162, %s176
      %p178 = scmp.eq.s32.totalorder %s33, 0
      %p179 = por %p177, %p178
      %s181 = sadd.s32 %s180, 1
      %p184 = scmp.eq.s32.totalorder %s27, 1
      %p185 = scmp.ne.s32.totalorder %s180, %s182
      %p186 = scmp.eq.s32.totalorder %s27, 0
      %p187 = por %p185, %p186
      %p188 = scmp.ne.s32.totalorder %s180, %s182
      %p189 = scmp.eq.s32.totalorder %s32, 1
      %p190 = por %p188, %p189
      %p191 = scmp.ne.s32.totalorder %s182, %s183
      %p192 = scmp.eq.s32.totalorder %s32, 0
      %p193 = por %p191, %p192
      %p194 = scmp.ne.s32.totalorder %s182, %s183
      %p195 = scmp.eq.s32.totalorder %s33, 1
      %p196 = por %p194, %p195
      %p198 = scmp.ne.s32.totalorder %s183, %s197
      %p199 = scmp.eq.s32.totalorder %s33, 0
      %p200 = por %p198, %p199
      %s201 = ssub.s32 %s34, %s46
      %s202 = ssub.s32 %s35, %s42
      %s203 = sor.u32 %s201, %s202
      %p204 = scmp.eq.s32.totalorder %s203, 0
      %s206 = sadd.s32 %s205, 1
      %s207 = scalar_select %p204, %s205, %s206
      %p210 = pneg %p204
      %p211 = scmp.eq.s32.totalorder %s27, 1
      %p212 = por %p210, %p211
      %p213 = scmp.ne.s32.totalorder %s205, %s208
      %p214 = scmp.eq.s32.totalorder %s27, 0
      %p215 = por %p213, %p214
      %p216 = scmp.ne.s32.totalorder %s205, %s208
      %p217 = scmp.eq.s32.totalorder %s32, 1
      %p218 = por %p216, %p217
      %p219 = scmp.ne.s32.totalorder %s208, %s209
      %p220 = scmp.eq.s32.totalorder %s32, 0
      %p221 = por %p219, %p220
      %p222 = scmp.ne.s32.totalorder %s208, %s209
      %p223 = scmp.eq.s32.totalorder %s33, 1
      %p224 = por %p222, %p223
      %p226 = scmp.ne.s32.totalorder %s209, %s225
      %p227 = scmp.eq.s32.totalorder %s33, 0
      %p228 = por %p226, %p227
      %s229 = ssub.s32 %s34, %s46
      %s230 = ssub.s32 %s35, %s42
      %s231 = sor.u32 %s229, %s230
      %p232 = scmp.eq.s32.totalorder %s231, 0
      %s234 = sadd.s32 %s233, 1
      %s235 = scalar_select %p232, %s233, %s234
      %p238 = pneg %p232
      %p239 = scmp.eq.s32.totalorder %s27, 1
      %p240 = por %p238, %p239
      %p241 = scmp.ne.s32.totalorder %s233, %s236
      %p242 = scmp.eq.s32.totalorder %s27, 0
      %p243 = por %p241, %p242
      %p244 = scmp.ne.s32.totalorder %s233, %s236
      %p245 = scmp.eq.s32.totalorder %s32, 1
      %p246 = por %p244, %p245
      %p247 = scmp.ne.s32.totalorder %s236, %s237
      %p248 = scmp.eq.s32.totalorder %s32, 0
      %p249 = por %p247, %p248
      %p250 = scmp.ne.s32.totalorder %s236, %s237
      %p251 = scmp.eq.s32.totalorder %s33, 1
      %p252 = por %p250, %p251
      %p254 = scmp.ne.s32.totalorder %s237, %s253
      %p255 = scmp.eq.s32.totalorder %s33, 0
      %p256 = por %p254, %p255
      %p257 = scmp.le.s32.totalorder 1, %s27
      %p258 = scmp.lt.s32.totalorder %s27, 3
      %p259 = pnand %p257, %p258
      %p260 = pneg %p259
      // Predicated region
      $region9: #{tpu_custom_call.1} parent=5 // pred_check
        _
      $region10: #{tpu_custom_call.1} parent=5 // pred_check_branch
        %262 = sbr.rel (%p259) target = $region12
      $region11: #{tpu_custom_call.1} parent=5 // pred_region
        %s263 = ssub.s32 %s27, 1
        // Predicated region
        $region13: #{tpu_custom_call.1} parent=11 // pred_check
          %p264 = pneg %p88
        $region14: #{tpu_custom_call.1} parent=11 // pred_check_branch
          %266 = sbr.rel (%p264) target = $region16
        $region15: #{tpu_custom_call.1} parent=11 // pred_region
          %s268 = ssub.s32 512, 512
          %269 = vsyncadd [#allocation6], %s268
          %s270 = sshll.u32 [#allocation5], 4
          %s271 = int_to_ptr.vmem [resolvable:$true] %s270
          %276 = dma.hbm_to_vmem [thread:$0]  %s1, 512, %s271, [#allocation6], 128, 128, 8
        $region16: #{tpu_custom_call.1} parent=11 // pred_fallthru
          _
        // Predicated region
        $region17: #{tpu_custom_call.1} parent=11 // pred_check
          %p277 = pneg %p109
        $region18: #{tpu_custom_call.1} parent=11 // pred_check_branch
          %279 = sbr.rel (%p277) target = $region20
        $region19: #{tpu_custom_call.1} parent=11 // pred_region
          %s281 = ssub.s32 16, 16
          %282 = vsyncadd [#allocation6], %s281
          %s284 = sshll.u32 [#allocation7], 4
          %s285 = int_to_ptr.vmem [resolvable:$true] %s284
          %287 = dma.hbm_to_vmem [thread:$0]  %s2, 16, %s285, [#allocation6]
        $region20: #{tpu_custom_call.1} parent=11 // pred_fallthru
          _
        // Predicated region
        $region21: #{tpu_custom_call.1} parent=11 // pred_check
          %p288 = pneg %p130
        $region22: #{tpu_custom_call.1} parent=11 // pred_check_branch
          %290 = sbr.rel (%p288) target = $region24
        $region23: #{tpu_custom_call.1} parent=11 // pred_region
          %s292 = ssub.s32 512, 512
          %293 = vsyncadd [#allocation9], %s292
          %s294 = sshll.u32 [#allocation8], 4
          %s295 = int_to_ptr.vmem [resolvable:$true] %s294
          %300 = dma.hbm_to_vmem [thread:$0]  %s3, 512, %s295, [#allocation9], 128, 128, 8
        $region24: #{tpu_custom_call.1} parent=11 // pred_fallthru
          _
        // Predicated region
        $region25: #{tpu_custom_call.1} parent=11 // pred_check
          %p301 = pneg %p151
        $region26: #{tpu_custom_call.1} parent=11 // pred_check_branch
          %303 = sbr.rel (%p301) target = $region28
        $region27: #{tpu_custom_call.1} parent=11 // pred_region
          %s305 = ssub.s32 16, 16
          %306 = vsyncadd [#allocation9], %s305
          %s308 = sshll.u32 [#allocation10], 4
          %s309 = int_to_ptr.vmem [resolvable:$true] %s308
          %311 = dma.hbm_to_vmem [thread:$0]  %s4, 16, %s309, [#allocation9]
        $region28: #{tpu_custom_call.1} parent=11 // pred_fallthru
          _
        // Predicated region
        $region29: #{tpu_custom_call.1} parent=11 // pred_check
          %p312 = pneg %p172
        $region30: #{tpu_custom_call.1} parent=11 // pred_check_branch
          %314 = sbr.rel (%p312) target = $region32
        $region31: #{tpu_custom_call.1} parent=11 // pred_region
          %s316 = ssub.s32 512, 512
          %317 = vsyncadd [#allocation12], %s316
          %s318 = sshll.u32 [#allocation11], 4
          %s319 = int_to_ptr.vmem [resolvable:$true] %s318
          %324 = dma.hbm_to_vmem [thread:$0]  %s5, 512, %s319, [#allocation12], 128, 128, 8
        $region32: #{tpu_custom_call.1} parent=11 // pred_fallthru
          _
        // Predicated region
        $region33: #{tpu_custom_call.1} parent=11 // pred_check
          %p325 = pneg %p193
        $region34: #{tpu_custom_call.1} parent=11 // pred_check_branch
          %327 = sbr.rel (%p325) target = $region36
        $region35: #{tpu_custom_call.1} parent=11 // pred_region
          %s329 = ssub.s32 16, 16
          %330 = vsyncadd [#allocation12], %s329
          %s332 = sshll.u32 [#allocation13], 4
          %s333 = int_to_ptr.vmem [resolvable:$true] %s332
          %335 = dma.hbm_to_vmem [thread:$0]  %s6, 16, %s333, [#allocation12]
        $region36: #{tpu_custom_call.1} parent=11 // pred_fallthru
          _
      $region12: #{tpu_custom_call.1} parent=5 // pred_fallthru
        _
      %p336 = scmp.lt.s32.totalorder %s27, 2
      // Predicated region
      $region37: #{tpu_custom_call.1} parent=5 // pred_check
        %p337 = pneg %p336
      $region38: #{tpu_custom_call.1} parent=5 // pred_check_branch
        %339 = sbr.rel (%p337) target = $region40
      $region39: #{tpu_custom_call.1} parent=5 // pred_region
        // Predicated region
        $region41: #{tpu_custom_call.1} parent=39 // pred_check
          %p340 = pneg %p61
        $region42: #{tpu_custom_call.1} parent=39 // pred_check_branch
          %342 = sbr.rel (%p340) target = $region44
        $region43: #{tpu_custom_call.1} parent=39 // pred_region
          %s343 = sand.u32 %s51, 1
          %s344 = scalar_lea.sflag [#allocation3], %s343
          %s345 = sand.u32 %s51, 1
          %s346 = smul.addr %s345, 8
          %s347 = scalar_lea.vmem [#allocation2], %s346
          %s349 = ssub.s32 128, 128
          %350 = vsyncadd %s344, %s349
          %s351 = sadd.s32 %s35, %s34
          %s352 = smul.addr %s351, 128
          %s353 = scalar_lea.hbm %s0, %s352
          %s355 = sshll.u32 %s347, 4
          %s356 = int_to_ptr.vmem [resolvable:$true] %s355
          %358 = dma.hbm_to_vmem [thread:$0]  %s353, 128, %s356, %s344
        $region44: #{tpu_custom_call.1} parent=39 // pred_fallthru
          _
      $region40: #{tpu_custom_call.1} parent=5 // pred_fallthru
        _
      %p359 = scmp.le.s32.totalorder 1, %s27
      %p360 = scmp.lt.s32.totalorder %s27, 3
      %p361 = pnand %p359, %p360
      %p362 = pneg %p361
      // Predicated region
      $region45: #{tpu_custom_call.1} parent=5 // pred_check
        _
      $region46: #{tpu_custom_call.1} parent=5 // pred_check_branch
        %364 = sbr.rel (%p361) target = $region48
      $region47: #{tpu_custom_call.1} parent=5 // pred_region
        %s365 = ssub.s32 %s27, 1
        %s366 = sand.u32 %s54, 1
        %s367 = scalar_lea.sflag [#allocation3], %s366
        %s368 = sand.u32 %s54, 1
        %s369 = smul.addr %s368, 8
        %s370 = scalar_lea.vmem [#allocation2], %s369
        // Predicated region
        $region49: #{tpu_custom_call.1} parent=47 // pred_check
          %p371 = pneg %p67
        $region50: #{tpu_custom_call.1} parent=47 // pred_check_branch
          %373 = sbr.rel (%p371) target = $region52
        $region51: #{tpu_custom_call.1} parent=47 // pred_region
          %374 = dma.done %s367, 128
        $region52: #{tpu_custom_call.1} parent=47 // pred_fallthru
          _
        // Predicated region
        $region53: #{tpu_custom_call.1} parent=47 // pred_check
          %p375 = pneg %p88
        $region54: #{tpu_custom_call.1} parent=47 // pred_check_branch
          %377 = sbr.rel (%p375) target = $region56
        $region55: #{tpu_custom_call.1} parent=47 // pred_region
          %378 = dma.done [#allocation6], 512
        $region56: #{tpu_custom_call.1} parent=47 // pred_fallthru
          _
        // Predicated region
        $region57: #{tpu_custom_call.1} parent=47 // pred_check
          %p379 = pneg %p109
        $region58: #{tpu_custom_call.1} parent=47 // pred_check_branch
          %381 = sbr.rel (%p379) target = $region60
        $region59: #{tpu_custom_call.1} parent=47 // pred_region
          %382 = dma.done [#allocation6], 16
        $region60: #{tpu_custom_call.1} parent=47 // pred_fallthru
          _
        // Predicated region
        $region61: #{tpu_custom_call.1} parent=47 // pred_check
          %p383 = pneg %p130
        $region62: #{tpu_custom_call.1} parent=47 // pred_check_branch
          %385 = sbr.rel (%p383) target = $region64
        $region63: #{tpu_custom_call.1} parent=47 // pred_region
          %386 = dma.done [#allocation9], 512
        $region64: #{tpu_custom_call.1} parent=47 // pred_fallthru
          _
        // Predicated region
        $region65: #{tpu_custom_call.1} parent=47 // pred_check
          %p387 = pneg %p151
        $region66: #{tpu_custom_call.1} parent=47 // pred_check_branch
          %389 = sbr.rel (%p387) target = $region68
        $region67: #{tpu_custom_call.1} parent=47 // pred_region
          %390 = dma.done [#allocation9], 16
        $region68: #{tpu_custom_call.1} parent=47 // pred_fallthru
          _
        // Predicated region
        $region69: #{tpu_custom_call.1} parent=47 // pred_check
          %p391 = pneg %p172
        $region70: #{tpu_custom_call.1} parent=47 // pred_check_branch
          %393 = sbr.rel (%p391) target = $region72
        $region71: #{tpu_custom_call.1} parent=47 // pred_region
          %394 = dma.done [#allocation12], 512
        $region72: #{tpu_custom_call.1} parent=47 // pred_fallthru
          _
        // Predicated region
        $region73: #{tpu_custom_call.1} parent=47 // pred_check
          %p395 = pneg %p193
        $region74: #{tpu_custom_call.1} parent=47 // pred_check_branch
          %397 = sbr.rel (%p395) target = $region76
        $region75: #{tpu_custom_call.1} parent=47 // pred_region
          %398 = dma.done [#allocation12], 16
        $region76: #{tpu_custom_call.1} parent=47 // pred_fallthru
          _
        %s399 = sand.u32 %s54, 1
        %s400 = scalar_lea.sflag [#allocation3], %s399
        %s401 = sand.u32 %s54, 1
        %s402 = smul.addr %s401, 8
        %s403 = scalar_lea.vmem [#allocation2], %s402
        %p404 = pneg %p67
        %p405 = pneg %p64
        %p406 = pneg %p88
        %p407 = pneg %p85
        %p408 = pneg %p109
        %p409 = pneg %p106
        %p410 = pneg %p130
        %p411 = pneg %p127
        %p412 = pneg %p151
        %p413 = pneg %p148
        %p414 = pneg %p172
        %p415 = pneg %p169
        %p416 = pneg %p193
        %p417 = pneg %p190
        %p418 = pneg %p221
        %p419 = pneg %p218
        %s420 = sand.u32 %s208, 1
        %s421 = scalar_lea.sflag [#allocation4], %s420
        %s422 = sand.u32 %s208, 1
        %s423 = smul.addr %s422, 8
        %s424 = scalar_lea.vmem [#allocation14], %s423
        %p425 = pneg %p249
        %p426 = pneg %p246
        %s427 = sand.u32 %s236, 1
        %s428 = scalar_lea.sflag [#allocation16], %s427
        %s429 = sand.u32 %s236, 1
        %s430 = smul.addr %s429, 8
        %s431 = scalar_lea.vmem [#allocation15], %s430
        %v432 = vld [vmem:[%s370] sm:$0xff]
        %v433 = vld [vmem:[#allocation5] sm:$0xff]
        %v434 = vld [vmem:[#allocation5 + $0x8] sm:$0xff]
        %v435 = vld [vmem:[#allocation5 + $0x10] sm:$0xff]
        %v436 = vld [vmem:[#allocation5 + $0x18] sm:$0xff]
        %v437 = vld [vmem:[#allocation7] sm:$0x1]
        %v439 = vlaneseq
        %v440 = vshrl.u32 %v439, 7
        %v441 = vsub.s32 0, %v440
        %v442 = vrot.slane %v437, %v441
        %vm444 = vcmask 261120
        %v446 = vsel %vm444, %v432, 0
        %448 = vmatprep.subr.mxu0 0.0
        %449 = vmatpush1.msra.mxu0 %v433
        %450 = vmatprep.subr.mxu0 0.0
        %451 = vmatpush1.msra.mxu0 %v434
        %452 = vmatprep.subr.mxu0 0.0
        %453 = vmatpush1.msra.mxu0 %v435
        %454 = vmatprep.subr.mxu0 0.0
        %455 = vmatpush1.msra.mxu0 %v436
        %456 = vmatprep.subr.mxu0 0.0
        %457 = vmatpush1.msra.mxu0 0.0
        %458 = vmatprep.subr.mxu0 0.0
        %459 = vmatpush1.msra.mxu0 0.0
        %460 = vmatprep.subr.mxu0 0.0
        %461 = vmatpush1.msra.mxu0 0.0
        %462 = vmatprep.subr.mxu0 0.0
        %463 = vmatpush1.msra.mxu0 0.0
        %464 = vmatprep.subr.mxu0 0.0
        %465 = vmatpush1.msra.mxu0 0.0
        %466 = vmatprep.subr.mxu0 0.0
        %467 = vmatpush1.msra.mxu0 0.0
        %468 = vmatprep.subr.mxu0 0.0
        %469 = vmatpush1.msra.mxu0 0.0
        %470 = vmatprep.subr.mxu0 0.0
        %471 = vmatpush1.msra.mxu0 0.0
        %472 = vmatprep.subr.mxu0 0.0
        %473 = vmatpush1.msra.mxu0 0.0
        %474 = vmatprep.subr.mxu0 0.0
        %475 = vmatpush1.msra.mxu0 0.0
        %476 = vmatprep.subr.mxu0 0.0
        %477 = vmatpush1.msra.mxu0 0.0
        %478 = vmatprep.subr.mxu0 0.0
        %479 = vmatpush1.msra.mxu0 0.0
        %480 = vmatprep.subr.mxu0 0.0
        %481 = vmatpush1.msra.mxu0 0.0
        %482 = vmatprep.subr.mxu0 0.0
        %483 = vmatpush1.msra.mxu0 0.0
        %484 = vmatprep.subr.mxu0 0.0
        %485 = vmatpush1.msra.mxu0 0.0
        %486 = vmatprep.subr.mxu0 0.0
        %487 = vmatpush1.msra.mxu0 0.0
        %488 = vmatprep.subr.mxu0 0.0
        %489 = vmatpush1.msra.mxu0 0.0
        %490 = vmatprep.subr.mxu0 0.0
        %491 = vmatpush1.msra.mxu0 0.0
        %492 = vmatprep.subr.mxu0 0.0
        %493 = vmatpush1.msra.mxu0 0.0
        %494 = vmatprep.subr.mxu0 0.0
        %495 = vmatpush1.msra.mxu0 0.0
        %496 = vmatprep.subr.mxu0 0.0
        %497 = vmatpush1.msra.mxu0 0.0
        %498 = vmatprep.subr.mxu0 0.0
        %499 = vmatpush1.msra.mxu0 0.0
        %500 = vmatprep.subr.mxu0 0.0
        %501 = vmatpush1.msra.mxu0 0.0
        %502 = vmatprep.subr.mxu0 0.0
        %503 = vmatpush1.msra.mxu0 0.0
        %504 = vmatprep.subr.mxu0 0.0
        %505 = vmatpush1.msra.mxu0 0.0
        %506 = vmatprep.subr.mxu0 0.0
        %507 = vmatpush1.msra.mxu0 0.0
        %508 = vmatprep.subr.mxu0 0.0
        %509 = vmatpush1.msra.mxu0 0.0
        %510 = vmatprep.subr.mxu0 0.0
        %511 = vmatpush1.msra.mxu0 0.0
        %512 = vmatprep.mubr.f32.mxu0 0.0
        %513 = vmatmul.mubr.f32.gmra.mrb[0].mxu0 %v446
        %v514 = vpop.f32.mrb[0].mxu0
        %v515 = vadd.f32 %v442, %v514
        %v516 = vpop.f32.mrb[0].mxu0
        %517 = vdwg.mxu0
        %vm518 = vcmask 130048
        %519 = vst.msk [vmem:[%s424] sm:$0xff] %vm518, %v515
        %v520 = vld [vmem:[#allocation8] sm:$0xff]
        %v521 = vld [vmem:[#allocation8 + $0x8] sm:$0xff]
        %v522 = vld [vmem:[#allocation8 + $0x10] sm:$0xff]
        %v523 = vld [vmem:[#allocation8 + $0x18] sm:$0xff]
        %v524 = vld [vmem:[#allocation10] sm:$0x1]
        %v526 = vlaneseq
        %v527 = vshrl.u32 %v526, 7
        %v528 = vsub.s32 0, %v527
        %v529 = vrot.slane %v524, %v528
        %531 = vmatprep.subr.mxu0 0.0
        %532 = vmatpush1.msra.mxu0 %v520
        %533 = vmatprep.subr.mxu0 0.0
        %534 = vmatpush1.msra.mxu0 %v521
        %535 = vmatprep.subr.mxu0 0.0
        %536 = vmatpush1.msra.mxu0 %v522
        %537 = vmatprep.subr.mxu0 0.0
        %538 = vmatpush1.msra.mxu0 %v523
        %539 = vmatprep.subr.mxu0 0.0
        %540 = vmatpush1.msra.mxu0 0.0
        %541 = vmatprep.subr.mxu0 0.0
        %542 = vmatpush1.msra.mxu0 0.0
        %543 = vmatprep.subr.mxu0 0.0
        %544 = vmatpush1.msra.mxu0 0.0
        %545 = vmatprep.subr.mxu0 0.0
        %546 = vmatpush1.msra.mxu0 0.0
        %547 = vmatprep.subr.mxu0 0.0
        %548 = vmatpush1.msra.mxu0 0.0
        %549 = vmatprep.subr.mxu0 0.0
        %550 = vmatpush1.msra.mxu0 0.0
        %551 = vmatprep.subr.mxu0 0.0
        %552 = vmatpush1.msra.mxu0 0.0
        %553 = vmatprep.subr.mxu0 0.0
        %554 = vmatpush1.msra.mxu0 0.0
        %555 = vmatprep.subr.mxu0 0.0
        %556 = vmatpush1.msra.mxu0 0.0
        %557 = vmatprep.subr.mxu0 0.0
        %558 = vmatpush1.msra.mxu0 0.0
        %559 = vmatprep.subr.mxu0 0.0
        %560 = vmatpush1.msra.mxu0 0.0
        %561 = vmatprep.subr.mxu0 0.0
        %562 = vmatpush1.msra.mxu0 0.0
        %563 = vmatprep.subr.mxu0 0.0
        %564 = vmatpush1.msra.mxu0 0.0
        %565 = vmatprep.subr.mxu0 0.0
        %566 = vmatpush1.msra.mxu0 0.0
        %567 = vmatprep.subr.mxu0 0.0
        %568 = vmatpush1.msra.mxu0 0.0
        %569 = vmatprep.subr.mxu0 0.0
        %570 = vmatpush1.msra.mxu0 0.0
        %571 = vmatprep.subr.mxu0 0.0
        %572 = vmatpush1.msra.mxu0 0.0
        %573 = vmatprep.subr.mxu0 0.0
        %574 = vmatpush1.msra.mxu0 0.0
        %575 = vmatprep.subr.mxu0 0.0
        %576 = vmatpush1.msra.mxu0 0.0
        %577 = vmatprep.subr.mxu0 0.0
        %578 = vmatpush1.msra.mxu0 0.0
        %579 = vmatprep.subr.mxu0 0.0
        %580 = vmatpush1.msra.mxu0 0.0
        %581 = vmatprep.subr.mxu0 0.0
        %582 = vmatpush1.msra.mxu0 0.0
        %583 = vmatprep.subr.mxu0 0.0
        %584 = vmatpush1.msra.mxu0 0.0
        %585 = vmatprep.subr.mxu0 0.0
        %586 = vmatpush1.msra.mxu0 0.0
        %587 = vmatprep.subr.mxu0 0.0
        %588 = vmatpush1.msra.mxu0 0.0
        %589 = vmatprep.subr.mxu0 0.0
        %590 = vmatpush1.msra.mxu0 0.0
        %591 = vmatprep.subr.mxu0 0.0
        %592 = vmatpush1.msra.mxu0 0.0
        %593 = vmatprep.subr.mxu0 0.0
        %594 = vmatpush1.msra.mxu0 0.0
        %595 = vmatprep.mubr.f32.mxu0 0.0
        %596 = vmatmul.mubr.f32.gmra.mrb[0].mxu0 %v446
        %v597 = vpop.f32.mrb[0].mxu0
        %v598 = vadd.f32 %v529, %v597
        %v599 = vpop.f32.mrb[0].mxu0
        %600 = vdwg.mxu0
        %v601 = vmax.f32 %v598, 0.0
        %v602 = vld [vmem:[#allocation11] sm:$0xff]
        %v603 = vld [vmem:[#allocation11 + $0x8] sm:$0xff]
        %v604 = vld [vmem:[#allocation11 + $0x10] sm:$0xff]
        %v605 = vld [vmem:[#allocation11 + $0x18] sm:$0xff]
        %v606 = vld [vmem:[#allocation13] sm:$0x1]
        %v608 = vlaneseq
        %v609 = vshrl.u32 %v608, 7
        %v610 = vsub.s32 0, %v609
        %v611 = vrot.slane %v606, %v610
        %v614 = vsel %vm444, %v601, 0
        %616 = vmatprep.subr.mxu0 0.0
        %617 = vmatpush1.msra.mxu0 %v602
        %618 = vmatprep.subr.mxu0 0.0
        %619 = vmatpush1.msra.mxu0 %v603
        %620 = vmatprep.subr.mxu0 0.0
        %621 = vmatpush1.msra.mxu0 %v604
        %622 = vmatprep.subr.mxu0 0.0
        %623 = vmatpush1.msra.mxu0 %v605
        %624 = vmatprep.subr.mxu0 0.0
        %625 = vmatpush1.msra.mxu0 0.0
        %626 = vmatprep.subr.mxu0 0.0
        %627 = vmatpush1.msra.mxu0 0.0
        %628 = vmatprep.subr.mxu0 0.0
        %629 = vmatpush1.msra.mxu0 0.0
        %630 = vmatprep.subr.mxu0 0.0
        %631 = vmatpush1.msra.mxu0 0.0
        %632 = vmatprep.subr.mxu0 0.0
        %633 = vmatpush1.msra.mxu0 0.0
        %634 = vmatprep.subr.mxu0 0.0
        %635 = vmatpush1.msra.mxu0 0.0
        %636 = vmatprep.subr.mxu0 0.0
        %637 = vmatpush1.msra.mxu0 0.0
        %638 = vmatprep.subr.mxu0 0.0
        %639 = vmatpush1.msra.mxu0 0.0
        %640 = vmatprep.subr.mxu0 0.0
        %641 = vmatpush1.msra.mxu0 0.0
        %642 = vmatprep.subr.mxu0 0.0
        %643 = vmatpush1.msra.mxu0 0.0
        %644 = vmatprep.subr.mxu0 0.0
        %645 = vmatpush1.msra.mxu0 0.0
        %646 = vmatprep.subr.mxu0 0.0
        %647 = vmatpush1.msra.mxu0 0.0
        %648 = vmatprep.subr.mxu0 0.0
        %649 = vmatpush1.msra.mxu0 0.0
        %650 = vmatprep.subr.mxu0 0.0
        %651 = vmatpush1.msra.mxu0 0.0
        %652 = vmatprep.subr.mxu0 0.0
        %653 = vmatpush1.msra.mxu0 0.0
        %654 = vmatprep.subr.mxu0 0.0
        %655 = vmatpush1.msra.mxu0 0.0
        %656 = vmatprep.subr.mxu0 0.0
        %657 = vmatpush1.msra.mxu0 0.0
        %658 = vmatprep.subr.mxu0 0.0
        %659 = vmatpush1.msra.mxu0 0.0
        %660 = vmatprep.subr.mxu0 0.0
        %661 = vmatpush1.msra.mxu0 0.0
        %662 = vmatprep.subr.mxu0 0.0
        %663 = vmatpush1.msra.mxu0 0.0
        %664 = vmatprep.subr.mxu0 0.0
        %665 = vmatpush1.msra.mxu0 0.0
        %666 = vmatprep.subr.mxu0 0.0
        %667 = vmatpush1.msra.mxu0 0.0
        %668 = vmatprep.subr.mxu0 0.0
        %669 = vmatpush1.msra.mxu0 0.0
        %670 = vmatprep.subr.mxu0 0.0
        %671 = vmatpush1.msra.mxu0 0.0
        %672 = vmatprep.subr.mxu0 0.0
        %673 = vmatpush1.msra.mxu0 0.0
        %674 = vmatprep.subr.mxu0 0.0
        %675 = vmatpush1.msra.mxu0 0.0
        %676 = vmatprep.subr.mxu0 0.0
        %677 = vmatpush1.msra.mxu0 0.0
        %678 = vmatprep.subr.mxu0 0.0
        %679 = vmatpush1.msra.mxu0 0.0
        %680 = vmatprep.mubr.f32.mxu0 0.0
        %681 = vmatmul.mubr.f32.gmra.mrb[0].mxu0 %v614
        %v682 = vpop.f32.mrb[0].mxu0
        %v683 = vadd.f32 %v611, %v682
        %v684 = vpop.f32.mrb[0].mxu0
        %685 = vdwg.mxu0
        %686 = vst.msk [vmem:[%s431] sm:$0xff] %vm518, %v683
        %s687 = sand.u32 %s208, 1
        %s688 = scalar_lea.sflag [#allocation4], %s687
        %s689 = sand.u32 %s208, 1
        %s690 = smul.addr %s689, 8
        %s691 = scalar_lea.vmem [#allocation14], %s690
        %s692 = sand.u32 %s236, 1
        %s693 = scalar_lea.sflag [#allocation16], %s692
        %s694 = sand.u32 %s236, 1
        %s695 = smul.addr %s694, 8
        %s696 = scalar_lea.vmem [#allocation15], %s695
        // Predicated region
        $region77: #{tpu_custom_call.1} parent=47 // pred_check
          %p697 = pneg %p218
        $region78: #{tpu_custom_call.1} parent=47 // pred_check_branch
          %699 = sbr.rel (%p697) target = $region80
        $region79: #{tpu_custom_call.1} parent=47 // pred_region
          %s701 = ssub.s32 128, 128
          %702 = vsyncadd %s688, %s701
          %s703 = sadd.s32 %s37, %s36
          %s704 = smul.addr %s703, 128
          %s705 = scalar_lea.hbm %s7, %s704
          %s707 = sshll.u32 %s691, 4
          %s708 = int_to_ptr.vmem [resolvable:$true] %s707
          %710 = dma.vmem_to_hbm [thread:$0]  %s708, 128, %s705, %s688
        $region80: #{tpu_custom_call.1} parent=47 // pred_fallthru
          _
        // Predicated region
        $region81: #{tpu_custom_call.1} parent=47 // pred_check
          %p711 = pneg %p246
        $region82: #{tpu_custom_call.1} parent=47 // pred_check_branch
          %713 = sbr.rel (%p711) target = $region84
        $region83: #{tpu_custom_call.1} parent=47 // pred_region
          %s715 = ssub.s32 128, 128
          %716 = vsyncadd %s693, %s715
          %s717 = sadd.s32 %s37, %s36
          %s718 = smul.addr %s717, 128
          %s719 = scalar_lea.hbm %s8, %s718
          %s721 = sshll.u32 %s696, 4
          %s722 = int_to_ptr.vmem [resolvable:$true] %s721
          %724 = dma.vmem_to_hbm [thread:$0]  %s722, 128, %s719, %s693
        $region84: #{tpu_custom_call.1} parent=47 // pred_fallthru
          _
      $region48: #{tpu_custom_call.1} parent=5 // pred_fallthru
        _
      %p725 = scmp.le.s32.totalorder 2, %s27
      // Predicated region
      $region85: #{tpu_custom_call.1} parent=5 // pred_check
        %p726 = pneg %p725
      $region86: #{tpu_custom_call.1} parent=5 // pred_check_branch
        %728 = sbr.rel (%p726) target = $region88
      $region87: #{tpu_custom_call.1} parent=5 // pred_region
        %s729 = ssub.s32 %s27, 2
        // Predicated region
        $region89: #{tpu_custom_call.1} parent=87 // pred_check
          %p730 = pneg %p224
        $region90: #{tpu_custom_call.1} parent=87 // pred_check_branch
          %732 = sbr.rel (%p730) target = $region92
        $region91: #{tpu_custom_call.1} parent=87 // pred_region
          %s733 = sand.u32 %s209, 1
          %s734 = scalar_lea.sflag [#allocation4], %s733
          %s735 = sand.u32 %s209, 1
          %s736 = smul.addr %s735, 8
          %s737 = scalar_lea.vmem [#allocation14], %s736
          %738 = dma.done %s734, 128
        $region92: #{tpu_custom_call.1} parent=87 // pred_fallthru
          _
        // Predicated region
        $region93: #{tpu_custom_call.1} parent=87 // pred_check
          %p739 = pneg %p252
        $region94: #{tpu_custom_call.1} parent=87 // pred_check_branch
          %741 = sbr.rel (%p739) target = $region96
        $region95: #{tpu_custom_call.1} parent=87 // pred_region
          %s742 = sand.u32 %s237, 1
          %s743 = scalar_lea.sflag [#allocation16], %s742
          %s744 = sand.u32 %s237, 1
          %s745 = smul.addr %s744, 8
          %s746 = scalar_lea.vmem [#allocation15], %s745
          %747 = dma.done %s743, 128
        $region96: #{tpu_custom_call.1} parent=87 // pred_fallthru
          _
      $region88: #{tpu_custom_call.1} parent=5 // pred_fallthru
        _
    $region6: #{tpu_custom_call.1} parent=1 // loop_footer
      %s31 = sadd.s32 1, %s27
    $region7: #{tpu_custom_call.1} parent=1 // loop_footer_branch
      %26 = sbr.rel target = $region3
    $region8: #{tpu_custom_call.1} parent=1 // loop_exit
      _
    %748 = vsyncpa [#allocation3], 1
    %s749 = scalar_lea.sflag [#allocation3], 1
    %750 = vsyncpa %s749, 1
    %751 = vsyncpa [#allocation6], 1
    %752 = vsyncpa [#allocation9], 1
    %753 = vsyncpa [#allocation12], 1
    %754 = vsyncpa [#allocation4], 1
    %s755 = scalar_lea.sflag [#allocation4], 1
    %756 = vsyncpa %s755, 1
    %757 = vsyncpa [#allocation16], 1
    %s758 = scalar_lea.sflag [#allocation16], 1
    %759 = vsyncpa %s758, 1

</llo_original>
